<compile_context>
chip_gen: v7x
topology: tpu7x:2x2x1
jax: 0.10.0
libtpu: 0.0.40
codegen_flags: <defaults>
</compile_context>

<pallas_src>
import functools

import jax
import jax.numpy as jnp
from jax.experimental import pallas as pl
from jax.experimental.pallas import tpu as pltpu

LANE = 128      # lane width (last dim)
SUBLANE = 8     # sublane width (second-to-last dim, fp32)


def _round_up(x: int, m: int) -> int:
    return (x + m - 1) // m * m


def _pad2(a, rows, cols):
    pr, pc = rows - a.shape[0], cols - a.shape[1]
    if pr == 0 and pc == 0:
        return a
    return jnp.pad(a, ((0, pr), (0, pc)))


def _default_single_call_max() -> int:
    """v7x (2 TensorCores/chip) prefers the grid path earlier for sharding."""
    try:
        kind = jax.devices()[0].device_kind.lower()
    except Exception:
        kind = ""
    return 512 if "v7" in kind else 1024


def prepare_actor_params(w1, b1, w2, b2, w3, b3):
    """Pad parameters ONCE (at init). Weights are (in, out), biases (1, out).

    Only hidden/output feature dims are lane-padded; the obs (K of layer 1)
    dim is left at its true size so `state` needs no feature padding.
    """
    obs, l1 = w1.shape
    l2 = w2.shape[1]
    act = w3.shape[1]
    l1_p = _round_up(l1, LANE)
    l2_p = _round_up(l2, LANE)
    act_p = _round_up(act, LANE)
    params = (
        _pad2(w1, obs, l1_p), _pad2(b1, 1, l1_p),
        _pad2(w2, l1_p, l2_p), _pad2(b2, 1, l2_p),
        _pad2(w3, l2_p, act_p), _pad2(b3, 1, act_p),
    )
    dims = dict(obs=obs, l1=l1, l2=l2, act=act,
                l1_p=l1_p, l2_p=l2_p, act_p=act_p)
    return params, dims


def actor_kernel(x_ref, w1_ref, b1_ref, w2_ref, b2_ref, w3_ref, b3_ref, o_ref,
                 *, compute_dtype):
    """Fused 3-layer MLP on one batch tile. Bias add + ReLU in fp32."""
    x = x_ref[...].astype(compute_dtype)
    h1 = jnp.dot(x, w1_ref[...].astype(compute_dtype),
                 preferred_element_type=jnp.float32) + b1_ref[...]
    h1 = jnp.maximum(h1, 0.0).astype(compute_dtype)
    h2 = jnp.dot(h1, w2_ref[...].astype(compute_dtype),
                 preferred_element_type=jnp.float32) + b2_ref[...]
    h2 = jnp.maximum(h2, 0.0).astype(compute_dtype)
    out = jnp.dot(h2, w3_ref[...].astype(compute_dtype),
                  preferred_element_type=jnp.float32) + b3_ref[...]
    o_ref[...] = out.astype(o_ref.dtype)


def actor_forward(state, padded_params, dims, *, block_b: int = 1024,
                  single_call_max_batch: int | None = None,
                  use_bf16: bool = False):
    """state: (B, obs_space) fp32 -> (B, action_space) fp32."""
    w1p, b1p, w2p, b2p, w3p, b3p = padded_params
    B, obs = state.shape
    assert obs == dims["obs"], "state feature dim mismatch"
    act, act_p = dims["act"], dims["act_p"]
    l1_p, l2_p = dims["l1_p"], dims["l2_p"]

    if single_call_max_batch is None:
        single_call_max_batch = _default_single_call_max()

    compute_dtype = jnp.bfloat16 if use_bf16 else jnp.float32
    kernel = functools.partial(actor_kernel, compute_dtype=compute_dtype)

    # --- Batch tiling -------------------------------------------------------
    if B <= single_call_max_batch:
        bt = _round_up(max(B, SUBLANE), SUBLANE)
        n_tiles = 1
    else:
        # Grid path: at least 2 tiles (2 TensorCores on v7x), tiles <= block_b.
        bt = max(SUBLANE, min(block_b, _round_up(pl.cdiv(B, 2), SUBLANE)))
        n_tiles = pl.cdiv(B, bt)
    b_pad = bt * n_tiles

    # Pad only the batch rows (no feature-axis pad / copy of the input).
    x = state if b_pad == B else jnp.pad(state, ((0, b_pad - B), (0, 0)))

    weight_bytes = sum(int(p.size) * p.dtype.itemsize for p in padded_params)
    cost = pl.CostEstimate(
        flops=2 * b_pad * (obs * l1_p + l1_p * l2_p + l2_p * act_p),
        transcendentals=0,
        bytes_accessed=int(x.size) * 4 + b_pad * act_p * 4 + weight_bytes,
    )

    out_shape = jax.ShapeDtypeStruct((b_pad, act_p), jnp.float32)
    vmem_limit = 64 * 1024 * 1024  # safe ceiling on v5e / v6e / v7x

    if n_tiles == 1:
        # Grid-free: one kernel invocation, everything VMEM-resident.
        vmem = functools.partial(pl.BlockSpec,
                                 memory_space=pltpu.MemorySpace.VMEM)
        out = pl.pallas_call(
            kernel,
            out_shape=out_shape,
            in_specs=[vmem()] * 7,
            out_specs=vmem(),
            compiler_params=pltpu.CompilerParams(vmem_limit_bytes=vmem_limit),
            cost_estimate=cost,
        )(x, w1p, b1p, w2p, b2p, w3p, b3p)
    else:
        # Batch grid ("parallel" -> megacore split on v7x). Weights/biases use
        # constant index_maps so they stay VMEM-resident across grid steps.
        out = pl.pallas_call(
            kernel,
            out_shape=out_shape,
            grid=(n_tiles,),
            in_specs=[
                pl.BlockSpec((bt, obs), lambda i: (i, 0)),
                pl.BlockSpec((obs, l1_p), lambda i: (0, 0)),
                pl.BlockSpec((1, l1_p), lambda i: (0, 0)),
                pl.BlockSpec((l1_p, l2_p), lambda i: (0, 0)),
                pl.BlockSpec((1, l2_p), lambda i: (0, 0)),
                pl.BlockSpec((l2_p, act_p), lambda i: (0, 0)),
                pl.BlockSpec((1, act_p), lambda i: (0, 0)),
            ],
            out_specs=pl.BlockSpec((bt, act_p), lambda i: (i, 0)),
            compiler_params=pltpu.CompilerParams(
                dimension_semantics=("parallel",),
                vmem_limit_bytes=vmem_limit),
            cost_estimate=cost,
        )(x, w1p, b1p, w2p, b2p, w3p, b3p)

    # Slice away batch padding and the padded action lanes.
    return out[:B, :act]


def reference_forward(state, w1, b1, w2, b2, w3, b3):
    h1 = jnp.maximum(state @ w1 + b1, 0.0)
    h2 = jnp.maximum(h1 @ w2 + b2, 0.0)
    return h2 @ w3 + b3


if __name__ == "__main__":
    # Small shapes consistent with Actor(obs_space, action_space, 400, 300)
    batch = 8
    obs_space = 32
    l1_size = 400
    l2_size = 300
    action_space = 4

    key = jax.random.PRNGKey(0)
    ks = jax.random.split(key, 8)

    # Deterministic synthetic parameters (PyTorch nn.Linear init ranges),
    # stored pre-transposed as (in, out) with (1, out) biases.
    s1 = 1.0 / jnp.sqrt(obs_space)
    s2 = 1.0 / jnp.sqrt(l1_size)
    s3 = 1.0 / jnp.sqrt(l2_size)
    w1 = jax.random.uniform(ks[0], (obs_space, l1_size), jnp.float32, -s1, s1)
    b1 = jax.random.uniform(ks[1], (1, l1_size), jnp.float32, -s1, s1)
    w2 = jax.random.uniform(ks[2], (l1_size, l2_size), jnp.float32, -s2, s2)
    b2 = jax.random.uniform(ks[3], (1, l2_size), jnp.float32, -s2, s2)
    w3 = jax.random.uniform(ks[4], (l2_size, action_space), jnp.float32, -s3, s3)
    b3 = jax.random.uniform(ks[5], (1, action_space), jnp.float32, -s3, s3)

    # Pad parameters ONCE (init-time), reuse for every forward call.
    padded_params, dims = prepare_actor_params(w1, b1, w2, b2, w3, b3)
    padded_params = jax.block_until_ready(padded_params)

    # --- Small batch: grid-free, fully VMEM-resident path. ------------------
    state = jax.random.normal(ks[6], (batch, obs_space), jnp.float32)
    out = actor_forward(state, padded_params, dims)
    out = jax.block_until_ready(out)
    ref = reference_forward(state, w1, b1, w2, b2, w3, b3)
    assert out.shape == (batch, action_space)
    assert jnp.allclose(out, ref, atol=1e-4, rtol=1e-4)

    # --- Larger batch: force the batch-tiled "parallel" grid path (>=2 tiles,
    #     VMEM-resident weights) by lowering the single-call threshold. ------
    big_batch = 256
    state_big = jax.random.normal(ks[7], (big_batch, obs_space), jnp.float32)
    out_big = actor_forward(state_big, padded_params, dims,
                            single_call_max_batch=64)
    out_big = jax.block_until_ready(out_big)
    ref_big = reference_forward(state_big, w1, b1, w2, b2, w3, b3)
    assert out_big.shape == (big_batch, action_space)
    assert jnp.allclose(out_big, ref_big, atol=1e-4, rtol=1e-4)

    print("KERNEL_OK")
</pallas_src>

<mosaic_0001>
module attributes {stable_mosaic.version = 11 : i64} {
  func.func @actor_kernel(%arg0: memref<8x32xf32, #tpu.memory_space<vmem>>, %arg1: memref<32x512xf32, #tpu.memory_space<vmem>>, %arg2: memref<1x512xf32, #tpu.memory_space<vmem>>, %arg3: memref<512x384xf32, #tpu.memory_space<vmem>>, %arg4: memref<1x384xf32, #tpu.memory_space<vmem>>, %arg5: memref<384x128xf32, #tpu.memory_space<vmem>>, %arg6: memref<1x128xf32, #tpu.memory_space<vmem>>, %arg7: memref<8x128xf32, #tpu.memory_space<vmem>>) attributes {dimension_semantics = [], scalar_prefetch = 0 : i64, scratch_operands = 0 : i64, tpu.core_type = #tpu.core_type<tc>} {
    %c0 = arith.constant 0 : index
    %c0_0 = arith.constant 0 : index
    %0 = vector.load %arg0[%c0, %c0_0] : memref<8x32xf32, #tpu.memory_space<vmem>>, vector<8x32xf32>
    %c0_1 = arith.constant 0 : index
    %c0_2 = arith.constant 0 : index
    %1 = vector.load %arg1[%c0_1, %c0_2] : memref<32x512xf32, #tpu.memory_space<vmem>>, vector<32x512xf32>
    %cst = arith.constant dense<0.000000e+00> : vector<8x512xf32>
    %2 = tpu.matmul %0, %1, %cst {dimension_numbers = #tpu.dot_dimension_numbers<[1], [0], [0], [1], [0, 0, 1, 1], [], []>} : vector<8x32xf32>, vector<32x512xf32>, vector<8x512xf32> -> vector<8x512xf32>
    %c0_3 = arith.constant 0 : index
    %c0_4 = arith.constant 0 : index
    %3 = vector.load %arg2[%c0_3, %c0_4] : memref<1x512xf32, #tpu.memory_space<vmem>>, vector<1x512xf32>
    %4 = vector.broadcast %3 : vector<1x512xf32> to vector<8x512xf32>
    %5 = arith.addf %2, %4 : vector<8x512xf32>
    %cst_5 = arith.constant 0.000000e+00 : f32
    %6 = vector.broadcast %cst_5 : f32 to vector<8x512xf32>
    %7 = arith.maximumf %5, %6 : vector<8x512xf32>
    %c0_6 = arith.constant 0 : index
    %c0_7 = arith.constant 0 : index
    %8 = vector.load %arg3[%c0_6, %c0_7] : memref<512x384xf32, #tpu.memory_space<vmem>>, vector<512x384xf32>
    %cst_8 = arith.constant dense<0.000000e+00> : vector<8x384xf32>
    %9 = tpu.matmul %7, %8, %cst_8 {dimension_numbers = #tpu.dot_dimension_numbers<[1], [0], [0], [1], [0, 0, 1, 1], [], []>} : vector<8x512xf32>, vector<512x384xf32>, vector<8x384xf32> -> vector<8x384xf32>
    %c0_9 = arith.constant 0 : index
    %c0_10 = arith.constant 0 : index
    %10 = vector.load %arg4[%c0_9, %c0_10] : memref<1x384xf32, #tpu.memory_space<vmem>>, vector<1x384xf32>
    %11 = vector.broadcast %10 : vector<1x384xf32> to vector<8x384xf32>
    %12 = arith.addf %9, %11 : vector<8x384xf32>
    %cst_11 = arith.constant 0.000000e+00 : f32
    %13 = vector.broadcast %cst_11 : f32 to vector<8x384xf32>
    %14 = arith.maximumf %12, %13 : vector<8x384xf32>
    %c0_12 = arith.constant 0 : index
    %c0_13 = arith.constant 0 : index
    %15 = vector.load %arg5[%c0_12, %c0_13] : memref<384x128xf32, #tpu.memory_space<vmem>>, vector<384x128xf32>
    %cst_14 = arith.constant dense<0.000000e+00> : vector<8x128xf32>
    %16 = tpu.matmul %14, %15, %cst_14 {dimension_numbers = #tpu.dot_dimension_numbers<[1], [0], [0], [1], [0, 0, 1, 1], [], []>} : vector<8x384xf32>, vector<384x128xf32>, vector<8x128xf32> -> vector<8x128xf32>
    %c0_15 = arith.constant 0 : index
    %c0_16 = arith.constant 0 : index
    %17 = vector.load %arg6[%c0_15, %c0_16] : memref<1x128xf32, #tpu.memory_space<vmem>>, vector<1x128xf32>
    %18 = vector.broadcast %17 : vector<1x128xf32> to vector<8x128xf32>
    %19 = arith.addf %16, %18 : vector<8x128xf32>
    %c0_17 = arith.constant 0 : index
    %c0_18 = arith.constant 0 : index
    %20 = vector.load %arg7[%c0_17, %c0_18] : memref<8x128xf32, #tpu.memory_space<vmem>>, vector<8x128xf32>
    tpu.vector_store %arg7[%c0_17, %c0_18], %19 {strides = array<i32>} : memref<8x128xf32, #tpu.memory_space<vmem>>, vector<8x128xf32>,
    return
  }
}

</mosaic_0001>

<llo_original>
// kernel: tpu_custom_call.1
$region0: #{tpu_custom_call.1}
  #allocation0 [shape = 'u32[]', space=smem, size = 0x4, offset = 0x4, fixed_abs, tag = 'smem constant byte address 0x4 - core index']
  #allocation1 [shape = 'u32[144,128]{1,0:T(1,128)}', space=vmem, size = 0x12000, scoped, tag = 'internal scratch']
  %s0 = inlined_call_operand.hbm [shape: f32[8,32], index: 0, kind: input, shape index: {}]
  %s1 = inlined_call_operand.hbm [shape: f32[32,512], index: 1, kind: input, shape index: {}]
  %s2 = inlined_call_operand.hbm [shape: f32[1,512], index: 2, kind: input, shape index: {}]
  %s3 = inlined_call_operand.hbm [shape: f32[512,384], index: 3, kind: input, shape index: {}]
  %s4 = inlined_call_operand.hbm [shape: f32[1,384], index: 4, kind: input, shape index: {}]
  %s5 = inlined_call_operand.hbm [shape: f32[384,128], index: 5, kind: input, shape index: {}]
  %s6 = inlined_call_operand.hbm [shape: f32[1,128], index: 6, kind: input, shape index: {}]
  %s7 = inlined_call_operand.hbm [shape: f32[8,128], index: 7, kind: output, shape index: {}]
  %s8 = sld [smem:[#allocation0]]
  $region66: #{tpu_custom_call.1} parent=0
    _
  %s10 = ssub.s32 1, %s8
  %s11 = scalar_select 0, %s10, %s8
  $region1: #{tpu_custom_call.1} parent=0
    #allocation2 [shape = 'u8[4096]{0}', space=vmem, size = 0x1000, scoped, tag = 'input window, operand 0, single buffered']
    #allocation3 [shape = 's32[1]{0}', space=sflag, size = 0x4, scoped, tag = 'scoped memory for tpu_custom_call.1']
    #allocation4 [shape = 's32[1]{0}', space=sflag, size = 0x4, scoped, tag = 'scoped memory for tpu_custom_call.1']
    #allocation5 [shape = 'u8[65536]{0}', space=vmem, size = 0x10000, scoped, tag = 'input window, operand 1, single buffered']
    #allocation6 [shape = 's32[1]{0}', space=sflag, size = 0x4, scoped, tag = 'scoped memory for tpu_custom_call.1']
    #allocation7 [shape = 'u8[2048]{0}', space=vmem, size = 0x800, scoped, tag = 'input window, operand 2, single buffered']
    #allocation8 [shape = 'u8[786432]{0}', space=vmem, size = 0xc0000, scoped, tag = 'input window, operand 3, single buffered']
    #allocation9 [shape = 's32[1]{0}', space=sflag, size = 0x4, scoped, tag = 'scoped memory for tpu_custom_call.1']
    #allocation10 [shape = 'u8[1536]{0}', space=vmem, size = 0x800, scoped, tag = 'input window, operand 4, single buffered']
    #allocation11 [shape = 'u8[196608]{0}', space=vmem, size = 0x30000, scoped, tag = 'input window, operand 5, single buffered']
    #allocation12 [shape = 's32[1]{0}', space=sflag, size = 0x4, scoped, tag = 'scoped memory for tpu_custom_call.1']
    #allocation13 [shape = 'u8[512]{0}', space=vmem, size = 0x400, scoped, tag = 'input window, operand 6, single buffered']
    #allocation14 [shape = 'u8[4096]{0}', space=vmem, size = 0x1000, scoped, tag = 'output window, operand 0, single buffered']
    %12 = vsyncpa [#allocation3], 0
    %13 = vsyncpa [#allocation6], 0
    %14 = vsyncpa [#allocation9], 0
    %15 = vsyncpa [#allocation12], 0
    %16 = vsyncpa [#allocation4], 0
    // Predicated region
    $region2: #{tpu_custom_call.1} parent=1 // pred_check
      _
    $region3: #{tpu_custom_call.1} parent=1 // pred_check_branch
      %18 = sbr.rel (0) target = $region5
    $region4: #{tpu_custom_call.1} parent=1 // pred_region
      %s20 = ssub.s32 128, 128
      %21 = vsyncadd [#allocation3], %s20
      %s23 = sshll.u32 [#allocation2], 4
      %s24 = int_to_ptr.vmem [resolvable:$true] %s23
      %26 = dma.hbm_to_vmem [thread:$0]  %s0, 128, %s24, [#allocation3]
    $region5: #{tpu_custom_call.1} parent=1 // pred_fallthru
      _
    // Predicated region
    $region6: #{tpu_custom_call.1} parent=1 // pred_check
      _
    $region7: #{tpu_custom_call.1} parent=1 // pred_check_branch
      %28 = sbr.rel (0) target = $region9
    $region8: #{tpu_custom_call.1} parent=1 // pred_region
      %s30 = ssub.s32 2048, 2048
      %31 = vsyncadd [#allocation6], %s30
      %s32 = sshll.u32 [#allocation5], 4
      %s33 = int_to_ptr.vmem [resolvable:$true] %s32
      %38 = dma.hbm_to_vmem [thread:$0]  %s1, 2048, %s33, [#allocation6], 512, 512, 32
    $region9: #{tpu_custom_call.1} parent=1 // pred_fallthru
      _
    // Predicated region
    $region10: #{tpu_custom_call.1} parent=1 // pred_check
      _
    $region11: #{tpu_custom_call.1} parent=1 // pred_check_branch
      %40 = sbr.rel (0) target = $region13
    $region12: #{tpu_custom_call.1} parent=1 // pred_region
      %s42 = ssub.s32 64, 64
      %43 = vsyncadd [#allocation6], %s42
      %s45 = sshll.u32 [#allocation7], 4
      %s46 = int_to_ptr.vmem [resolvable:$true] %s45
      %48 = dma.hbm_to_vmem [thread:$0]  %s2, 64, %s46, [#allocation6]
    $region13: #{tpu_custom_call.1} parent=1 // pred_fallthru
      _
    // Predicated region
    $region14: #{tpu_custom_call.1} parent=1 // pred_check
      _
    $region15: #{tpu_custom_call.1} parent=1 // pred_check_branch
      %50 = sbr.rel (0) target = $region17
    $region16: #{tpu_custom_call.1} parent=1 // pred_region
      %s52 = ssub.s32 24576, 24576
      %53 = vsyncadd [#allocation9], %s52
      %s54 = sshll.u32 [#allocation8], 4
      %s55 = int_to_ptr.vmem [resolvable:$true] %s54
      %60 = dma.hbm_to_vmem [thread:$0]  %s3, 24576, %s55, [#allocation9], 384, 384, 24
    $region17: #{tpu_custom_call.1} parent=1 // pred_fallthru
      _
    // Predicated region
    $region18: #{tpu_custom_call.1} parent=1 // pred_check
      _
    $region19: #{tpu_custom_call.1} parent=1 // pred_check_branch
      %62 = sbr.rel (0) target = $region21
    $region20: #{tpu_custom_call.1} parent=1 // pred_region
      %s64 = ssub.s32 48, 48
      %65 = vsyncadd [#allocation9], %s64
      %s67 = sshll.u32 [#allocation10], 4
      %s68 = int_to_ptr.vmem [resolvable:$true] %s67
      %70 = dma.hbm_to_vmem [thread:$0]  %s4, 48, %s68, [#allocation9]
    $region21: #{tpu_custom_call.1} parent=1 // pred_fallthru
      _
    // Predicated region
    $region22: #{tpu_custom_call.1} parent=1 // pred_check
      _
    $region23: #{tpu_custom_call.1} parent=1 // pred_check_branch
      %72 = sbr.rel (0) target = $region25
    $region24: #{tpu_custom_call.1} parent=1 // pred_region
      %s74 = ssub.s32 6144, 6144
      %75 = vsyncadd [#allocation12], %s74
      %s76 = sshll.u32 [#allocation11], 4
      %s77 = int_to_ptr.vmem [resolvable:$true] %s76
      %82 = dma.hbm_to_vmem [thread:$0]  %s5, 6144, %s77, [#allocation12], 128, 128, 8
    $region25: #{tpu_custom_call.1} parent=1 // pred_fallthru
      _
    // Predicated region
    $region26: #{tpu_custom_call.1} parent=1 // pred_check
      _
    $region27: #{tpu_custom_call.1} parent=1 // pred_check_branch
      %84 = sbr.rel (0) target = $region29
    $region28: #{tpu_custom_call.1} parent=1 // pred_region
      %s86 = ssub.s32 16, 16
      %87 = vsyncadd [#allocation12], %s86
      %s89 = sshll.u32 [#allocation13], 4
      %s90 = int_to_ptr.vmem [resolvable:$true] %s89
      %92 = dma.hbm_to_vmem [thread:$0]  %s6, 16, %s90, [#allocation12]
    $region29: #{tpu_custom_call.1} parent=1 // pred_fallthru
      _
    // Predicated region
    $region30: #{tpu_custom_call.1} parent=1 // pred_check
      _
    $region31: #{tpu_custom_call.1} parent=1 // pred_check_branch
      %94 = sbr.rel (0) target = $region33
    $region32: #{tpu_custom_call.1} parent=1 // pred_region
      %95 = dma.done [#allocation3], 128
    $region33: #{tpu_custom_call.1} parent=1 // pred_fallthru
      _
    // Predicated region
    $region34: #{tpu_custom_call.1} parent=1 // pred_check
      _
    $region35: #{tpu_custom_call.1} parent=1 // pred_check_branch
      %97 = sbr.rel (0) target = $region37
    $region36: #{tpu_custom_call.1} parent=1 // pred_region
      %98 = dma.done [#allocation6], 2048
    $region37: #{tpu_custom_call.1} parent=1 // pred_fallthru
      _
    // Predicated region
    $region38: #{tpu_custom_call.1} parent=1 // pred_check
      _
    $region39: #{tpu_custom_call.1} parent=1 // pred_check_branch
      %100 = sbr.rel (0) target = $region41
    $region40: #{tpu_custom_call.1} parent=1 // pred_region
      %101 = dma.done [#allocation6], 64
    $region41: #{tpu_custom_call.1} parent=1 // pred_fallthru
      _
    // Predicated region
    $region42: #{tpu_custom_call.1} parent=1 // pred_check
      _
    $region43: #{tpu_custom_call.1} parent=1 // pred_check_branch
      %103 = sbr.rel (0) target = $region45
    $region44: #{tpu_custom_call.1} parent=1 // pred_region
      %104 = dma.done [#allocation9], 24576
    $region45: #{tpu_custom_call.1} parent=1 // pred_fallthru
      _
    // Predicated region
    $region46: #{tpu_custom_call.1} parent=1 // pred_check
      _
    $region47: #{tpu_custom_call.1} parent=1 // pred_check_branch
      %106 = sbr.rel (0) target = $region49
    $region48: #{tpu_custom_call.1} parent=1 // pred_region
      %107 = dma.done [#allocation9], 48
    $region49: #{tpu_custom_call.1} parent=1 // pred_fallthru
      _
    // Predicated region
    $region50: #{tpu_custom_call.1} parent=1 // pred_check
      _
    $region51: #{tpu_custom_call.1} parent=1 // pred_check_branch
      %109 = sbr.rel (0) target = $region53
    $region52: #{tpu_custom_call.1} parent=1 // pred_region
      %110 = dma.done [#allocation12], 6144
    $region53: #{tpu_custom_call.1} parent=1 // pred_fallthru
      _
    // Predicated region
    $region54: #{tpu_custom_call.1} parent=1 // pred_check
      _
    $region55: #{tpu_custom_call.1} parent=1 // pred_check_branch
      %112 = sbr.rel (0) target = $region57
    $region56: #{tpu_custom_call.1} parent=1 // pred_region
      %113 = dma.done [#allocation12], 16
    $region57: #{tpu_custom_call.1} parent=1 // pred_fallthru
      _
    %v114 = vld [vmem:[#allocation2] sm:$0xff]
    %v115 = vld [vmem:[#allocation5] sm:$0xff]
    %v116 = vld [vmem:[#allocation5 + $0x8] sm:$0xff]
    %v117 = vld [vmem:[#allocation5 + $0x10] sm:$0xff]
    %v118 = vld [vmem:[#allocation5 + $0x18] sm:$0xff]
    %v119 = vld [vmem:[#allocation5 + $0x20] sm:$0xff]
    %v120 = vld [vmem:[#allocation5 + $0x28] sm:$0xff]
    %v121 = vld [vmem:[#allocation5 + $0x30] sm:$0xff]
    %v122 = vld [vmem:[#allocation5 + $0x38] sm:$0xff]
    %v123 = vld [vmem:[#allocation5 + $0x40] sm:$0xff]
    %v124 = vld [vmem:[#allocation5 + $0x48] sm:$0xff]
    %v125 = vld [vmem:[#allocation5 + $0x50] sm:$0xff]
    %v126 = vld [vmem:[#allocation5 + $0x58] sm:$0xff]
    %v127 = vld [vmem:[#allocation5 + $0x60] sm:$0xff]
    %v128 = vld [vmem:[#allocation5 + $0x68] sm:$0xff]
    %v129 = vld [vmem:[#allocation5 + $0x70] sm:$0xff]
    %v130 = vld [vmem:[#allocation5 + $0x78] sm:$0xff]
    %v131 = vld [vmem:[#allocation7] sm:$0xf]
    %v133 = vlaneseq
    %v134 = vshrl.u32 %v133, 7
    %v135 = vsub.s32 0, %v134
    %v136 = vrot.slane %v131, %v135
    %v137 = vlaneseq
    %v138 = vshrl.u32 %v137, 7
    %v139 = vsub.s32 1, %v138
    %v140 = vrot.slane %v131, %v139
    %v141 = vlaneseq
    %v142 = vshrl.u32 %v141, 7
    %v143 = vsub.s32 2, %v142
    %v144 = vrot.slane %v131, %v143
    %v145 = vlaneseq
    %v146 = vshrl.u32 %v145, 7
    %v147 = vsub.s32 3, %v146
    %v148 = vrot.slane %v131, %v147
    %vm153 = vcmask 261120
    %v155 = vsel %vm153, %v114, 0
    %157 = vmatprep.subr.mxu0 %v116
    %158 = vmatpush1.msra.mxu0 %v115
    %159 = vmatprep.subr.mxu0 %v120
    %160 = vmatpush1.msra.mxu0 %v119
    %161 = vmatprep.subr.mxu0 %v124
    %162 = vmatpush1.msra.mxu0 %v123
    %163 = vmatprep.subr.mxu0 %v128
    %164 = vmatpush1.msra.mxu0 %v127
    %165 = vmatprep.subr.mxu0 0.0
    %166 = vmatpush1.msra.mxu0 0.0
    %167 = vmatprep.subr.mxu0 0.0
    %168 = vmatpush1.msra.mxu0 0.0
    %169 = vmatprep.subr.mxu0 0.0
    %170 = vmatpush1.msra.mxu0 0.0
    %171 = vmatprep.subr.mxu0 0.0
    %172 = vmatpush1.msra.mxu0 0.0
    %173 = vmatprep.subr.mxu0 0.0
    %174 = vmatpush1.msra.mxu0 0.0
    %175 = vmatprep.subr.mxu0 0.0
    %176 = vmatpush1.msra.mxu0 0.0
    %177 = vmatprep.subr.mxu0 0.0
    %178 = vmatpush1.msra.mxu0 0.0
    %179 = vmatprep.subr.mxu0 0.0
    %180 = vmatpush1.msra.mxu0 0.0
    %181 = vmatprep.subr.mxu0 0.0
    %182 = vmatpush1.msra.mxu0 0.0
    %183 = vmatprep.subr.mxu0 0.0
    %184 = vmatpush1.msra.mxu0 0.0
    %185 = vmatprep.subr.mxu0 0.0
    %186 = vmatpush1.msra.mxu0 0.0
    %187 = vmatprep.subr.mxu0 0.0
    %188 = vmatpush1.msra.mxu0 0.0
    %189 = vmatprep.subr.mxu0 0.0
    %190 = vmatpush1.msra.mxu0 0.0
    %191 = vmatprep.subr.mxu0 0.0
    %192 = vmatpush1.msra.mxu0 0.0
    %193 = vmatprep.subr.mxu0 0.0
    %194 = vmatpush1.msra.mxu0 0.0
    %195 = vmatprep.subr.mxu0 0.0
    %196 = vmatpush1.msra.mxu0 0.0
    %197 = vmatprep.subr.mxu0 0.0
    %198 = vmatpush1.msra.mxu0 0.0
    %199 = vmatprep.subr.mxu0 0.0
    %200 = vmatpush1.msra.mxu0 0.0
    %201 = vmatprep.subr.mxu0 0.0
    %202 = vmatpush1.msra.mxu0 0.0
    %203 = vmatprep.subr.mxu0 0.0
    %204 = vmatpush1.msra.mxu0 0.0
    %205 = vmatprep.subr.mxu0 0.0
    %206 = vmatpush1.msra.mxu0 0.0
    %207 = vmatprep.subr.mxu0 0.0
    %208 = vmatpush1.msra.mxu0 0.0
    %209 = vmatprep.subr.mxu0 0.0
    %210 = vmatpush1.msra.mxu0 0.0
    %211 = vmatprep.subr.mxu0 0.0
    %212 = vmatpush1.msra.mxu0 0.0
    %213 = vmatprep.subr.mxu0 0.0
    %214 = vmatpush1.msra.mxu0 0.0
    %215 = vmatprep.subr.mxu0 0.0
    %216 = vmatpush1.msra.mxu0 0.0
    %217 = vmatprep.subr.mxu0 0.0
    %218 = vmatpush1.msra.mxu0 0.0
    %219 = vmatprep.subr.mxu0 0.0
    %220 = vmatpush1.msra.mxu0 0.0
    %221 = vmatprep.mubr.f32.mxu0 0.0
    %222 = vmatmul.mubr.f32.gmra.mrb[0].mxu0 %v155
    %v223 = vpop.f32.mrb[0].mxu0
    %v224 = vadd.f32 %v136, %v223
    %v225 = vpop.f32.mrb[0].mxu0
    %v226 = vadd.f32 %v140, %v225
    %227 = vdwg.mxu0
    %228 = vmatprep.subr.mxu0 %v118
    %229 = vmatpush1.msra.mxu0 %v117
    %230 = vmatprep.subr.mxu0 %v122
    %231 = vmatpush1.msra.mxu0 %v121
    %232 = vmatprep.subr.mxu0 %v126
    %233 = vmatpush1.msra.mxu0 %v125
    %234 = vmatprep.subr.mxu0 %v130
    %235 = vmatpush1.msra.mxu0 %v129
    %236 = vmatprep.subr.mxu0 0.0
    %237 = vmatpush1.msra.mxu0 0.0
    %238 = vmatprep.subr.mxu0 0.0
    %239 = vmatpush1.msra.mxu0 0.0
    %240 = vmatprep.subr.mxu0 0.0
    %241 = vmatpush1.msra.mxu0 0.0
    %242 = vmatprep.subr.mxu0 0.0
    %243 = vmatpush1.msra.mxu0 0.0
    %244 = vmatprep.subr.mxu0 0.0
    %245 = vmatpush1.msra.mxu0 0.0
    %246 = vmatprep.subr.mxu0 0.0
    %247 = vmatpush1.msra.mxu0 0.0
    %248 = vmatprep.subr.mxu0 0.0
    %249 = vmatpush1.msra.mxu0 0.0
    %250 = vmatprep.subr.mxu0 0.0
    %251 = vmatpush1.msra.mxu0 0.0
    %252 = vmatprep.subr.mxu0 0.0
    %253 = vmatpush1.msra.mxu0 0.0
    %254 = vmatprep.subr.mxu0 0.0
    %255 = vmatpush1.msra.mxu0 0.0
    %256 = vmatprep.subr.mxu0 0.0
    %257 = vmatpush1.msra.mxu0 0.0
    %258 = vmatprep.subr.mxu0 0.0
    %259 = vmatpush1.msra.mxu0 0.0
    %260 = vmatprep.subr.mxu0 0.0
    %261 = vmatpush1.msra.mxu0 0.0
    %262 = vmatprep.subr.mxu0 0.0
    %263 = vmatpush1.msra.mxu0 0.0
    %264 = vmatprep.subr.mxu0 0.0
    %265 = vmatpush1.msra.mxu0 0.0
    %266 = vmatprep.subr.mxu0 0.0
    %267 = vmatpush1.msra.mxu0 0.0
    %268 = vmatprep.subr.mxu0 0.0
    %269 = vmatpush1.msra.mxu0 0.0
    %270 = vmatprep.subr.mxu0 0.0
    %271 = vmatpush1.msra.mxu0 0.0
    %272 = vmatprep.subr.mxu0 0.0
    %273 = vmatpush1.msra.mxu0 0.0
    %274 = vmatprep.subr.mxu0 0.0
    %275 = vmatpush1.msra.mxu0 0.0
    %276 = vmatprep.subr.mxu0 0.0
    %277 = vmatpush1.msra.mxu0 0.0
    %278 = vmatprep.subr.mxu0 0.0
    %279 = vmatpush1.msra.mxu0 0.0
    %280 = vmatprep.subr.mxu0 0.0
    %281 = vmatpush1.msra.mxu0 0.0
    %282 = vmatprep.subr.mxu0 0.0
    %283 = vmatpush1.msra.mxu0 0.0
    %284 = vmatprep.subr.mxu0 0.0
    %285 = vmatpush1.msra.mxu0 0.0
    %286 = vmatprep.subr.mxu0 0.0
    %287 = vmatpush1.msra.mxu0 0.0
    %288 = vmatprep.subr.mxu0 0.0
    %289 = vmatpush1.msra.mxu0 0.0
    %290 = vmatprep.subr.mxu0 0.0
    %291 = vmatpush1.msra.mxu0 0.0
    %292 = vmatprep.mubr.f32.mxu0 0.0
    %293 = vmatmul.mubr.f32.gmra.mrb[0].mxu0 %v155
    %v294 = vpop.f32.mrb[0].mxu0
    %v295 = vadd.f32 %v144, %v294
    %v296 = vpop.f32.mrb[0].mxu0
    %v297 = vadd.f32 %v148, %v296
    %298 = vdwg.mxu0
    %v299 = vmax.f32 %v224, 0.0
    %v300 = vmax.f32 %v226, 0.0
    %v301 = vmax.f32 %v295, 0.0
    %v302 = vmax.f32 %v297, 0.0
    %v303 = vld [vmem:[#allocation8] sm:$0xff]
    %v304 = vld [vmem:[#allocation8 + $0x8] sm:$0xff]
    %v305 = vld [vmem:[#allocation8 + $0x10] sm:$0xff]
    %v306 = vld [vmem:[#allocation8 + $0x18] sm:$0xff]
    %v307 = vld [vmem:[#allocation8 + $0x20] sm:$0xff]
    %v308 = vld [vmem:[#allocation8 + $0x28] sm:$0xff]
    %v309 = vld [vmem:[#allocation8 + $0x30] sm:$0xff]
    %v310 = vld [vmem:[#allocation8 + $0x38] sm:$0xff]
    %v311 = vld [vmem:[#allocation8 + $0x40] sm:$0xff]
    %v312 = vld [vmem:[#allocation8 + $0x48] sm:$0xff]
    %v313 = vld [vmem:[#allocation8 + $0x50] sm:$0xff]
    %v314 = vld [vmem:[#allocation8 + $0x58] sm:$0xff]
    %v315 = vld [vmem:[#allocation8 + $0x60] sm:$0xff]
    %v316 = vld [vmem:[#allocation8 + $0x68] sm:$0xff]
    %v317 = vld [vmem:[#allocation8 + $0x70] sm:$0xff]
    %v318 = vld [vmem:[#allocation8 + $0x78] sm:$0xff]
    %v319 = vld [vmem:[#allocation8 + $0x80] sm:$0xff]
    %v320 = vld [vmem:[#allocation8 + $0x88] sm:$0xff]
    %v321 = vld [vmem:[#allocation8 + $0x90] sm:$0xff]
    %v322 = vld [vmem:[#allocation8 + $0x98] sm:$0xff]
    %v323 = vld [vmem:[#allocation8 + $0xa0] sm:$0xff]
    %v324 = vld [vmem:[#allocation8 + $0xa8] sm:$0xff]
    %v325 = vld [vmem:[#allocation8 + $0xb0] sm:$0xff]
    %v326 = vld [vmem:[#allocation8 + $0xb8] sm:$0xff]
    %v327 = vld [vmem:[#allocation8 + $0xc0] sm:$0xff]
    %v328 = vld [vmem:[#allocation8 + $0xc8] sm:$0xff]
    %v329 = vld [vmem:[#allocation8 + $0xd0] sm:$0xff]
    %v330 = vld [vmem:[#allocation8 + $0xd8] sm:$0xff]
    %v331 = vld [vmem:[#allocation8 + $0xe0] sm:$0xff]
    %v332 = vld [vmem:[#allocation8 + $0xe8] sm:$0xff]
    %v333 = vld [vmem:[#allocation8 + $0xf0] sm:$0xff]
    %v334 = vld [vmem:[#allocation8 + $0xf8] sm:$0xff]
    %v335 = vld [vmem:[#allocation8 + $0x100] sm:$0xff]
    %v336 = vld [vmem:[#allocation8 + $0x108] sm:$0xff]
    %v337 = vld [vmem:[#allocation8 + $0x110] sm:$0xff]
    %v338 = vld [vmem:[#allocation8 + $0x118] sm:$0xff]
    %v339 = vld [vmem:[#allocation8 + $0x120] sm:$0xff]
    %v340 = vld [vmem:[#allocation8 + $0x128] sm:$0xff]
    %v341 = vld [vmem:[#allocation8 + $0x130] sm:$0xff]
    %v342 = vld [vmem:[#allocation8 + $0x138] sm:$0xff]
    %v343 = vld [vmem:[#allocation8 + $0x140] sm:$0xff]
    %v344 = vld [vmem:[#allocation8 + $0x148] sm:$0xff]
    %v345 = vld [vmem:[#allocation8 + $0x150] sm:$0xff]
    %v346 = vld [vmem:[#allocation8 + $0x158] sm:$0xff]
    %v347 = vld [vmem:[#allocation8 + $0x160] sm:$0xff]
    %v348 = vld [vmem:[#allocation8 + $0x168] sm:$0xff]
    %v349 = vld [vmem:[#allocation8 + $0x170] sm:$0xff]
    %v350 = vld [vmem:[#allocation8 + $0x178] sm:$0xff]
    %v351 = vld [vmem:[#allocation8 + $0x180] sm:$0xff]
    %v352 = vld [vmem:[#allocation8 + $0x188] sm:$0xff]
    %v353 = vld [vmem:[#allocation8 + $0x190] sm:$0xff]
    %v354 = vld [vmem:[#allocation8 + $0x198] sm:$0xff]
    %v355 = vld [vmem:[#allocation8 + $0x1a0] sm:$0xff]
    %v356 = vld [vmem:[#allocation8 + $0x1a8] sm:$0xff]
    %v357 = vld [vmem:[#allocation8 + $0x1b0] sm:$0xff]
    %v358 = vld [vmem:[#allocation8 + $0x1b8] sm:$0xff]
    %v359 = vld [vmem:[#allocation8 + $0x1c0] sm:$0xff]
    %v360 = vld [vmem:[#allocation8 + $0x1c8] sm:$0xff]
    %v361 = vld [vmem:[#allocation8 + $0x1d0] sm:$0xff]
    %v362 = vld [vmem:[#allocation8 + $0x1d8] sm:$0xff]
    %v363 = vld [vmem:[#allocation8 + $0x1e0] sm:$0xff]
    %v364 = vld [vmem:[#allocation8 + $0x1e8] sm:$0xff]
    %v365 = vld [vmem:[#allocation8 + $0x1f0] sm:$0xff]
    %v366 = vld [vmem:[#allocation8 + $0x1f8] sm:$0xff]
    %v367 = vld [vmem:[#allocation8 + $0x200] sm:$0xff]
    %v368 = vld [vmem:[#allocation8 + $0x208] sm:$0xff]
    %v369 = vld [vmem:[#allocation8 + $0x210] sm:$0xff]
    %v370 = vld [vmem:[#allocation8 + $0x218] sm:$0xff]
    %v371 = vld [vmem:[#allocation8 + $0x220] sm:$0xff]
    %v372 = vld [vmem:[#allocation8 + $0x228] sm:$0xff]
    %v373 = vld [vmem:[#allocation8 + $0x230] sm:$0xff]
    %v374 = vld [vmem:[#allocation8 + $0x238] sm:$0xff]
    %v375 = vld [vmem:[#allocation8 + $0x240] sm:$0xff]
    %v376 = vld [vmem:[#allocation8 + $0x248] sm:$0xff]
    %v377 = vld [vmem:[#allocation8 + $0x250] sm:$0xff]
    %v378 = vld [vmem:[#allocation8 + $0x258] sm:$0xff]
    %v379 = vld [vmem:[#allocation8 + $0x260] sm:$0xff]
    %v380 = vld [vmem:[#allocation8 + $0x268] sm:$0xff]
    %v381 = vld [vmem:[#allocation8 + $0x270] sm:$0xff]
    %v382 = vld [vmem:[#allocation8 + $0x278] sm:$0xff]
    %v383 = vld [vmem:[#allocation8 + $0x280] sm:$0xff]
    %v384 = vld [vmem:[#allocation8 + $0x288] sm:$0xff]
    %v385 = vld [vmem:[#allocation8 + $0x290] sm:$0xff]
    %v386 = vld [vmem:[#allocation8 + $0x298] sm:$0xff]
    %v387 = vld [vmem:[#allocation8 + $0x2a0] sm:$0xff]
    %v388 = vld [vmem:[#allocation8 + $0x2a8] sm:$0xff]
    %v389 = vld [vmem:[#allocation8 + $0x2b0] sm:$0xff]
    %v390 = vld [vmem:[#allocation8 + $0x2b8] sm:$0xff]
    %v391 = vld [vmem:[#allocation8 + $0x2c0] sm:$0xff]
    %v392 = vld [vmem:[#allocation8 + $0x2c8] sm:$0xff]
    %v393 = vld [vmem:[#allocation8 + $0x2d0] sm:$0xff]
    %v394 = vld [vmem:[#allocation8 + $0x2d8] sm:$0xff]
    %v395 = vld [vmem:[#allocation8 + $0x2e0] sm:$0xff]
    %v396 = vld [vmem:[#allocation8 + $0x2e8] sm:$0xff]
    %v397 = vld [vmem:[#allocation8 + $0x2f0] sm:$0xff]
    %v398 = vld [vmem:[#allocation8 + $0x2f8] sm:$0xff]
    %v399 = vld [vmem:[#allocation8 + $0x300] sm:$0xff]
    %v400 = vld [vmem:[#allocation8 + $0x308] sm:$0xff]
    %v401 = vld [vmem:[#allocation8 + $0x310] sm:$0xff]
    %v402 = vld [vmem:[#allocation8 + $0x318] sm:$0xff]
    %v403 = vld [vmem:[#allocation8 + $0x320] sm:$0xff]
    %v404 = vld [vmem:[#allocation8 + $0x328] sm:$0xff]
    %v405 = vld [vmem:[#allocation8 + $0x330] sm:$0xff]
    %v406 = vld [vmem:[#allocation8 + $0x338] sm:$0xff]
    %v407 = vld [vmem:[#allocation8 + $0x340] sm:$0xff]
    %v408 = vld [vmem:[#allocation8 + $0x348] sm:$0xff]
    %v409 = vld [vmem:[#allocation8 + $0x350] sm:$0xff]
    %v410 = vld [vmem:[#allocation8 + $0x358] sm:$0xff]
    %v411 = vld [vmem:[#allocation8 + $0x360] sm:$0xff]
    %v412 = vld [vmem:[#allocation8 + $0x368] sm:$0xff]
    %v413 = vld [vmem:[#allocation8 + $0x370] sm:$0xff]
    %v414 = vld [vmem:[#allocation8 + $0x378] sm:$0xff]
    %v415 = vld [vmem:[#allocation8 + $0x380] sm:$0xff]
    %v416 = vld [vmem:[#allocation8 + $0x388] sm:$0xff]
    %v417 = vld [vmem:[#allocation8 + $0x390] sm:$0xff]
    %v418 = vld [vmem:[#allocation8 + $0x398] sm:$0xff]
    %v419 = vld [vmem:[#allocation8 + $0x3a0] sm:$0xff]
    %v420 = vld [vmem:[#allocation8 + $0x3a8] sm:$0xff]
    %v421 = vld [vmem:[#allocation8 + $0x3b0] sm:$0xff]
    %v422 = vld [vmem:[#allocation8 + $0x3b8] sm:$0xff]
    %v423 = vld [vmem:[#allocation8 + $0x3c0] sm:$0xff]
    %v424 = vld [vmem:[#allocation8 + $0x3c8] sm:$0xff]
    %v425 = vld [vmem:[#allocation8 + $0x3d0] sm:$0xff]
    %v426 = vld [vmem:[#allocation8 + $0x3d8] sm:$0xff]
    %v427 = vld [vmem:[#allocation8 + $0x3e0] sm:$0xff]
    %v428 = vld [vmem:[#allocation8 + $0x3e8] sm:$0xff]
    %v429 = vld [vmem:[#allocation8 + $0x3f0] sm:$0xff]
    %v430 = vld [vmem:[#allocation8 + $0x3f8] sm:$0xff]
    %v431 = vld [vmem:[#allocation8 + $0x400] sm:$0xff]
    %v432 = vld [vmem:[#allocation8 + $0x408] sm:$0xff]
    %v433 = vld [vmem:[#allocation8 + $0x410] sm:$0xff]
    %v434 = vld [vmem:[#allocation8 + $0x418] sm:$0xff]
    %v435 = vld [vmem:[#allocation8 + $0x420] sm:$0xff]
    %v436 = vld [vmem:[#allocation8 + $0x428] sm:$0xff]
    %v437 = vld [vmem:[#allocation8 + $0x430] sm:$0xff]
    %v438 = vld [vmem:[#allocation8 + $0x438] sm:$0xff]
    %v439 = vld [vmem:[#allocation8 + $0x440] sm:$0xff]
    %v440 = vld [vmem:[#allocation8 + $0x448] sm:$0xff]
    %v441 = vld [vmem:[#allocation8 + $0x450] sm:$0xff]
    %v442 = vld [vmem:[#allocation8 + $0x458] sm:$0xff]
    %v443 = vld [vmem:[#allocation8 + $0x460] sm:$0xff]
    %v444 = vld [vmem:[#allocation8 + $0x468] sm:$0xff]
    %v445 = vld [vmem:[#allocation8 + $0x470] sm:$0xff]
    %v446 = vld [vmem:[#allocation8 + $0x478] sm:$0xff]
    %v447 = vld [vmem:[#allocation8 + $0x480] sm:$0xff]
    %v448 = vld [vmem:[#allocation8 + $0x488] sm:$0xff]
    %v449 = vld [vmem:[#allocation8 + $0x490] sm:$0xff]
    %v450 = vld [vmem:[#allocation8 + $0x498] sm:$0xff]
    %v451 = vld [vmem:[#allocation8 + $0x4a0] sm:$0xff]
    %v452 = vld [vmem:[#allocation8 + $0x4a8] sm:$0xff]
    %v453 = vld [vmem:[#allocation8 + $0x4b0] sm:$0xff]
    %v454 = vld [vmem:[#allocation8 + $0x4b8] sm:$0xff]
    %v455 = vld [vmem:[#allocation8 + $0x4c0] sm:$0xff]
    %v456 = vld [vmem:[#allocation8 + $0x4c8] sm:$0xff]
    %v457 = vld [vmem:[#allocation8 + $0x4d0] sm:$0xff]
    %v458 = vld [vmem:[#allocation8 + $0x4d8] sm:$0xff]
    %v459 = vld [vmem:[#allocation8 + $0x4e0] sm:$0xff]
    %v460 = vld [vmem:[#allocation8 + $0x4e8] sm:$0xff]
    %v461 = vld [vmem:[#allocation8 + $0x4f0] sm:$0xff]
    %v462 = vld [vmem:[#allocation8 + $0x4f8] sm:$0xff]
    %v463 = vld [vmem:[#allocation8 + $0x500] sm:$0xff]
    %v464 = vld [vmem:[#allocation8 + $0x508] sm:$0xff]
    %v465 = vld [vmem:[#allocation8 + $0x510] sm:$0xff]
    %v466 = vld [vmem:[#allocation8 + $0x518] sm:$0xff]
    %v467 = vld [vmem:[#allocation8 + $0x520] sm:$0xff]
    %v468 = vld [vmem:[#allocation8 + $0x528] sm:$0xff]
    %v469 = vld [vmem:[#allocation8 + $0x530] sm:$0xff]
    %v470 = vld [vmem:[#allocation8 + $0x538] sm:$0xff]
    %v471 = vld [vmem:[#allocation8 + $0x540] sm:$0xff]
    %v472 = vld [vmem:[#allocation8 + $0x548] sm:$0xff]
    %v473 = vld [vmem:[#allocation8 + $0x550] sm:$0xff]
    %v474 = vld [vmem:[#allocation8 + $0x558] sm:$0xff]
    %v475 = vld [vmem:[#allocation8 + $0x560] sm:$0xff]
    %v476 = vld [vmem:[#allocation8 + $0x568] sm:$0xff]
    %v477 = vld [vmem:[#allocation8 + $0x570] sm:$0xff]
    %v478 = vld [vmem:[#allocation8 + $0x578] sm:$0xff]
    %v479 = vld [vmem:[#allocation8 + $0x580] sm:$0xff]
    %v480 = vld [vmem:[#allocation8 + $0x588] sm:$0xff]
    %v481 = vld [vmem:[#allocation8 + $0x590] sm:$0xff]
    %v482 = vld [vmem:[#allocation8 + $0x598] sm:$0xff]
    %v483 = vld [vmem:[#allocation8 + $0x5a0] sm:$0xff]
    %v484 = vld [vmem:[#allocation8 + $0x5a8] sm:$0xff]
    %v485 = vld [vmem:[#allocation8 + $0x5b0] sm:$0xff]
    %v486 = vld [vmem:[#allocation8 + $0x5b8] sm:$0xff]
    %v487 = vld [vmem:[#allocation8 + $0x5c0] sm:$0xff]
    %v488 = vld [vmem:[#allocation8 + $0x5c8] sm:$0xff]
    %v489 = vld [vmem:[#allocation8 + $0x5d0] sm:$0xff]
    %v490 = vld [vmem:[#allocation8 + $0x5d8] sm:$0xff]
    %v491 = vld [vmem:[#allocation8 + $0x5e0] sm:$0xff]
    %v492 = vld [vmem:[#allocation8 + $0x5e8] sm:$0xff]
    %v493 = vld [vmem:[#allocation8 + $0x5f0] sm:$0xff]
    %v494 = vld [vmem:[#allocation8 + $0x5f8] sm:$0xff]
    %v495 = vld [vmem:[#allocation10] sm:$0x7]
    %v497 = vlaneseq
    %v498 = vshrl.u32 %v497, 7
    %v499 = vsub.s32 0, %v498
    %v500 = vrot.slane %v495, %v499
    %v501 = vlaneseq
    %v502 = vshrl.u32 %v501, 7
    %v503 = vsub.s32 1, %v502
    %v504 = vrot.slane %v495, %v503
    %v505 = vlaneseq
    %v506 = vshrl.u32 %v505, 7
    %v507 = vsub.s32 2, %v506
    %v508 = vrot.slane %v495, %v507
    %512 = vmatprep.subr.mxu0 %v304
    %513 = vmatpush1.msra.mxu0 %v303
    %514 = vmatprep.subr.mxu0 %v307
    %515 = vmatpush1.msra.mxu0 %v306
    %516 = vmatprep.subr.mxu0 %v310
    %517 = vmatpush1.msra.mxu0 %v309
    %518 = vmatprep.subr.mxu0 %v313
    %519 = vmatpush1.msra.mxu0 %v312
    %520 = vmatprep.subr.mxu0 %v316
    %521 = vmatpush1.msra.mxu0 %v315
    %522 = vmatprep.subr.mxu0 %v319
    %523 = vmatpush1.msra.mxu0 %v318
    %524 = vmatprep.subr.mxu0 %v322
    %525 = vmatpush1.msra.mxu0 %v321
    %526 = vmatprep.subr.mxu0 %v325
    %527 = vmatpush1.msra.mxu0 %v324
    %528 = vmatprep.subr.mxu0 %v328
    %529 = vmatpush1.msra.mxu0 %v327
    %530 = vmatprep.subr.mxu0 %v331
    %531 = vmatpush1.msra.mxu0 %v330
    %532 = vmatprep.subr.mxu0 %v334
    %533 = vmatpush1.msra.mxu0 %v333
    %534 = vmatprep.subr.mxu0 %v337
    %535 = vmatpush1.msra.mxu0 %v336
    %536 = vmatprep.subr.mxu0 %v340
    %537 = vmatpush1.msra.mxu0 %v339
    %538 = vmatprep.subr.mxu0 %v343
    %539 = vmatpush1.msra.mxu0 %v342
    %540 = vmatprep.subr.mxu0 %v346
    %541 = vmatpush1.msra.mxu0 %v345
    %542 = vmatprep.subr.mxu0 %v349
    %543 = vmatpush1.msra.mxu0 %v348
    %544 = vmatprep.subr.mxu0 %v352
    %545 = vmatpush1.msra.mxu0 %v351
    %546 = vmatprep.subr.mxu0 %v355
    %547 = vmatpush1.msra.mxu0 %v354
    %548 = vmatprep.subr.mxu0 %v358
    %549 = vmatpush1.msra.mxu0 %v357
    %550 = vmatprep.subr.mxu0 %v361
    %551 = vmatpush1.msra.mxu0 %v360
    %552 = vmatprep.subr.mxu0 %v364
    %553 = vmatpush1.msra.mxu0 %v363
    %554 = vmatprep.subr.mxu0 %v367
    %555 = vmatpush1.msra.mxu0 %v366
    %556 = vmatprep.subr.mxu0 %v370
    %557 = vmatpush1.msra.mxu0 %v369
    %558 = vmatprep.subr.mxu0 %v373
    %559 = vmatpush1.msra.mxu0 %v372
    %560 = vmatprep.subr.mxu0 %v376
    %561 = vmatpush1.msra.mxu0 %v375
    %562 = vmatprep.subr.mxu0 %v379
    %563 = vmatpush1.msra.mxu0 %v378
    %564 = vmatprep.subr.mxu0 %v382
    %565 = vmatpush1.msra.mxu0 %v381
    %566 = vmatprep.subr.mxu0 %v385
    %567 = vmatpush1.msra.mxu0 %v384
    %568 = vmatprep.subr.mxu0 %v388
    %569 = vmatpush1.msra.mxu0 %v387
    %570 = vmatprep.subr.mxu0 %v391
    %571 = vmatpush1.msra.mxu0 %v390
    %572 = vmatprep.subr.mxu0 %v394
    %573 = vmatpush1.msra.mxu0 %v393
    %574 = vmatprep.subr.mxu0 %v397
    %575 = vmatpush1.msra.mxu0 %v396
    %576 = vmatprep.mubr.f32.mxu0 %v300
    %577 = vmatmul.mubr.f32.gmra.mrb[0].mxu0 %v299
    %v578 = vpop.f32.mrb[0].mxu0
    %v579 = vadd.f32 %v500, %v578
    %v580 = vpop.f32.mrb[0].mxu0
    %v581 = vadd.f32 %v504, %v580
    %582 = vdwg.mxu0
    %583 = vmatprep.subr.mxu0 %v400
    %584 = vmatpush1.msra.mxu0 %v399
    %585 = vmatprep.subr.mxu0 %v403
    %586 = vmatpush1.msra.mxu0 %v402
    %587 = vmatprep.subr.mxu0 %v406
    %588 = vmatpush1.msra.mxu0 %v405
    %589 = vmatprep.subr.mxu0 %v409
    %590 = vmatpush1.msra.mxu0 %v408
    %591 = vmatprep.subr.mxu0 %v412
    %592 = vmatpush1.msra.mxu0 %v411
    %593 = vmatprep.subr.mxu0 %v415
    %594 = vmatpush1.msra.mxu0 %v414
    %595 = vmatprep.subr.mxu0 %v418
    %596 = vmatpush1.msra.mxu0 %v417
    %597 = vmatprep.subr.mxu0 %v421
    %598 = vmatpush1.msra.mxu0 %v420
    %599 = vmatprep.subr.mxu0 %v424
    %600 = vmatpush1.msra.mxu0 %v423
    %601 = vmatprep.subr.mxu0 %v427
    %602 = vmatpush1.msra.mxu0 %v426
    %603 = vmatprep.subr.mxu0 %v430
    %604 = vmatpush1.msra.mxu0 %v429
    %605 = vmatprep.subr.mxu0 %v433
    %606 = vmatpush1.msra.mxu0 %v432
    %607 = vmatprep.subr.mxu0 %v436
    %608 = vmatpush1.msra.mxu0 %v435
    %609 = vmatprep.subr.mxu0 %v439
    %610 = vmatpush1.msra.mxu0 %v438
    %611 = vmatprep.subr.mxu0 %v442
    %612 = vmatpush1.msra.mxu0 %v441
    %613 = vmatprep.subr.mxu0 %v445
    %614 = vmatpush1.msra.mxu0 %v444
    %615 = vmatprep.subr.mxu0 %v448
    %616 = vmatpush1.msra.mxu0 %v447
    %617 = vmatprep.subr.mxu0 %v451
    %618 = vmatpush1.msra.mxu0 %v450
    %619 = vmatprep.subr.mxu0 %v454
    %620 = vmatpush1.msra.mxu0 %v453
    %621 = vmatprep.subr.mxu0 %v457
    %622 = vmatpush1.msra.mxu0 %v456
    %623 = vmatprep.subr.mxu0 %v460
    %624 = vmatpush1.msra.mxu0 %v459
    %625 = vmatprep.subr.mxu0 %v463
    %626 = vmatpush1.msra.mxu0 %v462
    %627 = vmatprep.subr.mxu0 %v466
    %628 = vmatpush1.msra.mxu0 %v465
    %629 = vmatprep.subr.mxu0 %v469
    %630 = vmatpush1.msra.mxu0 %v468
    %631 = vmatprep.subr.mxu0 %v472
    %632 = vmatpush1.msra.mxu0 %v471
    %633 = vmatprep.subr.mxu0 %v475
    %634 = vmatpush1.msra.mxu0 %v474
    %635 = vmatprep.subr.mxu0 %v478
    %636 = vmatpush1.msra.mxu0 %v477
    %637 = vmatprep.subr.mxu0 %v481
    %638 = vmatpush1.msra.mxu0 %v480
    %639 = vmatprep.subr.mxu0 %v484
    %640 = vmatpush1.msra.mxu0 %v483
    %641 = vmatprep.subr.mxu0 %v487
    %642 = vmatpush1.msra.mxu0 %v486
    %643 = vmatprep.subr.mxu0 %v490
    %644 = vmatpush1.msra.mxu0 %v489
    %645 = vmatprep.subr.mxu0 %v493
    %646 = vmatpush1.msra.mxu0 %v492
    %647 = vmatprep.mubr.f32.mxu0 %v302
    %648 = vmatmul.mubr.f32.gmra.mrb[0].mxu0 %v301
    %v649 = vpop.f32.mrb[0].mxu0
    %v650 = vadd.f32 %v579, %v649
    %v651 = vpop.f32.mrb[0].mxu0
    %v652 = vadd.f32 %v581, %v651
    %653 = vdwg.mxu0
    %654 = vmatprep.subr.mxu0 0.0
    %655 = vmatpush1.msra.mxu0 %v305
    %656 = vmatprep.subr.mxu0 0.0
    %657 = vmatpush1.msra.mxu0 %v308
    %658 = vmatprep.subr.mxu0 0.0
    %659 = vmatpush1.msra.mxu0 %v311
    %660 = vmatprep.subr.mxu0 0.0
    %661 = vmatpush1.msra.mxu0 %v314
    %662 = vmatprep.subr.mxu0 0.0
    %663 = vmatpush1.msra.mxu0 %v317
    %664 = vmatprep.subr.mxu0 0.0
    %665 = vmatpush1.msra.mxu0 %v320
    %666 = vmatprep.subr.mxu0 0.0
    %667 = vmatpush1.msra.mxu0 %v323
    %668 = vmatprep.subr.mxu0 0.0
    %669 = vmatpush1.msra.mxu0 %v326
    %670 = vmatprep.subr.mxu0 0.0
    %671 = vmatpush1.msra.mxu0 %v329
    %672 = vmatprep.subr.mxu0 0.0
    %673 = vmatpush1.msra.mxu0 %v332
    %674 = vmatprep.subr.mxu0 0.0
    %675 = vmatpush1.msra.mxu0 %v335
    %676 = vmatprep.subr.mxu0 0.0
    %677 = vmatpush1.msra.mxu0 %v338
    %678 = vmatprep.subr.mxu0 0.0
    %679 = vmatpush1.msra.mxu0 %v341
    %680 = vmatprep.subr.mxu0 0.0
    %681 = vmatpush1.msra.mxu0 %v344
    %682 = vmatprep.subr.mxu0 0.0
    %683 = vmatpush1.msra.mxu0 %v347
    %684 = vmatprep.subr.mxu0 0.0
    %685 = vmatpush1.msra.mxu0 %v350
    %686 = vmatprep.subr.mxu0 0.0
    %687 = vmatpush1.msra.mxu0 %v353
    %688 = vmatprep.subr.mxu0 0.0
    %689 = vmatpush1.msra.mxu0 %v356
    %690 = vmatprep.subr.mxu0 0.0
    %691 = vmatpush1.msra.mxu0 %v359
    %692 = vmatprep.subr.mxu0 0.0
    %693 = vmatpush1.msra.mxu0 %v362
    %694 = vmatprep.subr.mxu0 0.0
    %695 = vmatpush1.msra.mxu0 %v365
    %696 = vmatprep.subr.mxu0 0.0
    %697 = vmatpush1.msra.mxu0 %v368
    %698 = vmatprep.subr.mxu0 0.0
    %699 = vmatpush1.msra.mxu0 %v371
    %700 = vmatprep.subr.mxu0 0.0
    %701 = vmatpush1.msra.mxu0 %v374
    %702 = vmatprep.subr.mxu0 0.0
    %703 = vmatpush1.msra.mxu0 %v377
    %704 = vmatprep.subr.mxu0 0.0
    %705 = vmatpush1.msra.mxu0 %v380
    %706 = vmatprep.subr.mxu0 0.0
    %707 = vmatpush1.msra.mxu0 %v383
    %708 = vmatprep.subr.mxu0 0.0
    %709 = vmatpush1.msra.mxu0 %v386
    %710 = vmatprep.subr.mxu0 0.0
    %711 = vmatpush1.msra.mxu0 %v389
    %712 = vmatprep.subr.mxu0 0.0
    %713 = vmatpush1.msra.mxu0 %v392
    %714 = vmatprep.subr.mxu0 0.0
    %715 = vmatpush1.msra.mxu0 %v395
    %716 = vmatprep.subr.mxu0 0.0
    %717 = vmatpush1.msra.mxu0 %v398
    %718 = vmatprep.mubr.f32.mxu0 %v300
    %719 = vmatmul.mubr.f32.gmra.mrb[0].mxu0 %v299
    %v720 = vpop.f32.mrb[0].mxu0
    %v721 = vadd.f32 %v508, %v720
    %v722 = vpop.f32.mrb[0].mxu0
    %723 = vdwg.mxu0
    %724 = vmatprep.subr.mxu0 0.0
    %725 = vmatpush1.msra.mxu0 %v401
    %726 = vmatprep.subr.mxu0 0.0
    %727 = vmatpush1.msra.mxu0 %v404
    %728 = vmatprep.subr.mxu0 0.0
    %729 = vmatpush1.msra.mxu0 %v407
    %730 = vmatprep.subr.mxu0 0.0
    %731 = vmatpush1.msra.mxu0 %v410
    %732 = vmatprep.subr.mxu0 0.0
    %733 = vmatpush1.msra.mxu0 %v413
    %734 = vmatprep.subr.mxu0 0.0
    %735 = vmatpush1.msra.mxu0 %v416
    %736 = vmatprep.subr.mxu0 0.0
    %737 = vmatpush1.msra.mxu0 %v419
    %738 = vmatprep.subr.mxu0 0.0
    %739 = vmatpush1.msra.mxu0 %v422
    %740 = vmatprep.subr.mxu0 0.0
    %741 = vmatpush1.msra.mxu0 %v425
    %742 = vmatprep.subr.mxu0 0.0
    %743 = vmatpush1.msra.mxu0 %v428
    %744 = vmatprep.subr.mxu0 0.0
    %745 = vmatpush1.msra.mxu0 %v431
    %746 = vmatprep.subr.mxu0 0.0
    %747 = vmatpush1.msra.mxu0 %v434
    %748 = vmatprep.subr.mxu0 0.0
    %749 = vmatpush1.msra.mxu0 %v437
    %750 = vmatprep.subr.mxu0 0.0
    %751 = vmatpush1.msra.mxu0 %v440
    %752 = vmatprep.subr.mxu0 0.0
    %753 = vmatpush1.msra.mxu0 %v443
    %754 = vmatprep.subr.mxu0 0.0
    %755 = vmatpush1.msra.mxu0 %v446
    %756 = vmatprep.subr.mxu0 0.0
    %757 = vmatpush1.msra.mxu0 %v449
    %758 = vmatprep.subr.mxu0 0.0
    %759 = vmatpush1.msra.mxu0 %v452
    %760 = vmatprep.subr.mxu0 0.0
    %761 = vmatpush1.msra.mxu0 %v455
    %762 = vmatprep.subr.mxu0 0.0
    %763 = vmatpush1.msra.mxu0 %v458
    %764 = vmatprep.subr.mxu0 0.0
    %765 = vmatpush1.msra.mxu0 %v461
    %766 = vmatprep.subr.mxu0 0.0
    %767 = vmatpush1.msra.mxu0 %v464
    %768 = vmatprep.subr.mxu0 0.0
    %769 = vmatpush1.msra.mxu0 %v467
    %770 = vmatprep.subr.mxu0 0.0
    %771 = vmatpush1.msra.mxu0 %v470
    %772 = vmatprep.subr.mxu0 0.0
    %773 = vmatpush1.msra.mxu0 %v473
    %774 = vmatprep.subr.mxu0 0.0
    %775 = vmatpush1.msra.mxu0 %v476
    %776 = vmatprep.subr.mxu0 0.0
    %777 = vmatpush1.msra.mxu0 %v479
    %778 = vmatprep.subr.mxu0 0.0
    %779 = vmatpush1.msra.mxu0 %v482
    %780 = vmatprep.subr.mxu0 0.0
    %781 = vmatpush1.msra.mxu0 %v485
    %782 = vmatprep.subr.mxu0 0.0
    %783 = vmatpush1.msra.mxu0 %v488
    %784 = vmatprep.subr.mxu0 0.0
    %785 = vmatpush1.msra.mxu0 %v491
    %786 = vmatprep.subr.mxu0 0.0
    %787 = vmatpush1.msra.mxu0 %v494
    %788 = vmatprep.mubr.f32.mxu0 %v302
    %789 = vmatmul.mubr.f32.gmra.mrb[0].mxu0 %v301
    %v790 = vpop.f32.mrb[0].mxu0
    %v791 = vadd.f32 %v721, %v790
    %v792 = vpop.f32.mrb[0].mxu0
    %793 = vdwg.mxu0
    %v794 = vmax.f32 %v650, 0.0
    %v795 = vmax.f32 %v652, 0.0
    %v796 = vmax.f32 %v791, 0.0
    %v797 = vld [vmem:[#allocation11] sm:$0xff]
    %v798 = vld [vmem:[#allocation11 + $0x8] sm:$0xff]
    %v799 = vld [vmem:[#allocation11 + $0x10] sm:$0xff]
    %v800 = vld [vmem:[#allocation11 + $0x18] sm:$0xff]
    %v801 = vld [vmem:[#allocation11 + $0x20] sm:$0xff]
    %v802 = vld [vmem:[#allocation11 + $0x28] sm:$0xff]
    %v803 = vld [vmem:[#allocation11 + $0x30] sm:$0xff]
    %v804 = vld [vmem:[#allocation11 + $0x38] sm:$0xff]
    %v805 = vld [vmem:[#allocation11 + $0x40] sm:$0xff]
    %v806 = vld [vmem:[#allocation11 + $0x48] sm:$0xff]
    %v807 = vld [vmem:[#allocation11 + $0x50] sm:$0xff]
    %v808 = vld [vmem:[#allocation11 + $0x58] sm:$0xff]
    %v809 = vld [vmem:[#allocation11 + $0x60] sm:$0xff]
    %v810 = vld [vmem:[#allocation11 + $0x68] sm:$0xff]
    %v811 = vld [vmem:[#allocation11 + $0x70] sm:$0xff]
    %v812 = vld [vmem:[#allocation11 + $0x78] sm:$0xff]
    %v813 = vld [vmem:[#allocation11 + $0x80] sm:$0xff]
    %v814 = vld [vmem:[#allocation11 + $0x88] sm:$0xff]
    %v815 = vld [vmem:[#allocation11 + $0x90] sm:$0xff]
    %v816 = vld [vmem:[#allocation11 + $0x98] sm:$0xff]
    %v817 = vld [vmem:[#allocation11 + $0xa0] sm:$0xff]
    %v818 = vld [vmem:[#allocation11 + $0xa8] sm:$0xff]
    %v819 = vld [vmem:[#allocation11 + $0xb0] sm:$0xff]
    %v820 = vld [vmem:[#allocation11 + $0xb8] sm:$0xff]
    %v821 = vld [vmem:[#allocation11 + $0xc0] sm:$0xff]
    %v822 = vld [vmem:[#allocation11 + $0xc8] sm:$0xff]
    %v823 = vld [vmem:[#allocation11 + $0xd0] sm:$0xff]
    %v824 = vld [vmem:[#allocation11 + $0xd8] sm:$0xff]
    %v825 = vld [vmem:[#allocation11 + $0xe0] sm:$0xff]
    %v826 = vld [vmem:[#allocation11 + $0xe8] sm:$0xff]
    %v827 = vld [vmem:[#allocation11 + $0xf0] sm:$0xff]
    %v828 = vld [vmem:[#allocation11 + $0xf8] sm:$0xff]
    %v829 = vld [vmem:[#allocation11 + $0x100] sm:$0xff]
    %v830 = vld [vmem:[#allocation11 + $0x108] sm:$0xff]
    %v831 = vld [vmem:[#allocation11 + $0x110] sm:$0xff]
    %v832 = vld [vmem:[#allocation11 + $0x118] sm:$0xff]
    %v833 = vld [vmem:[#allocation11 + $0x120] sm:$0xff]
    %v834 = vld [vmem:[#allocation11 + $0x128] sm:$0xff]
    %v835 = vld [vmem:[#allocation11 + $0x130] sm:$0xff]
    %v836 = vld [vmem:[#allocation11 + $0x138] sm:$0xff]
    %v837 = vld [vmem:[#allocation11 + $0x140] sm:$0xff]
    %v838 = vld [vmem:[#allocation11 + $0x148] sm:$0xff]
    %v839 = vld [vmem:[#allocation11 + $0x150] sm:$0xff]
    %v840 = vld [vmem:[#allocation11 + $0x158] sm:$0xff]
    %v841 = vld [vmem:[#allocation11 + $0x160] sm:$0xff]
    %v842 = vld [vmem:[#allocation11 + $0x168] sm:$0xff]
    %v843 = vld [vmem:[#allocation11 + $0x170] sm:$0xff]
    %v844 = vld [vmem:[#allocation11 + $0x178] sm:$0xff]
    %v845 = vld [vmem:[#allocation13] sm:$0x1]
    %v847 = vlaneseq
    %v848 = vshrl.u32 %v847, 7
    %v849 = vsub.s32 0, %v848
    %v850 = vrot.slane %v845, %v849
    %852 = vmatprep.subr.mxu0 0.0
    %853 = vmatpush1.msra.mxu0 %v797
    %854 = vmatprep.subr.mxu0 0.0
    %855 = vmatpush1.msra.mxu0 %v798
    %856 = vmatprep.subr.mxu0 0.0
    %857 = vmatpush1.msra.mxu0 %v799
    %858 = vmatprep.subr.mxu0 0.0
    %859 = vmatpush1.msra.mxu0 %v800
    %860 = vmatprep.subr.mxu0 0.0
    %861 = vmatpush1.msra.mxu0 %v801
    %862 = vmatprep.subr.mxu0 0.0
    %863 = vmatpush1.msra.mxu0 %v802
    %864 = vmatprep.subr.mxu0 0.0
    %865 = vmatpush1.msra.mxu0 %v803
    %866 = vmatprep.subr.mxu0 0.0
    %867 = vmatpush1.msra.mxu0 %v804
    %868 = vmatprep.subr.mxu0 0.0
    %869 = vmatpush1.msra.mxu0 %v805
    %870 = vmatprep.subr.mxu0 0.0
    %871 = vmatpush1.msra.mxu0 %v806
    %872 = vmatprep.subr.mxu0 0.0
    %873 = vmatpush1.msra.mxu0 %v807
    %874 = vmatprep.subr.mxu0 0.0
    %875 = vmatpush1.msra.mxu0 %v808
    %876 = vmatprep.subr.mxu0 0.0
    %877 = vmatpush1.msra.mxu0 %v809
    %878 = vmatprep.subr.mxu0 0.0
    %879 = vmatpush1.msra.mxu0 %v810
    %880 = vmatprep.subr.mxu0 0.0
    %881 = vmatpush1.msra.mxu0 %v811
    %882 = vmatprep.subr.mxu0 0.0
    %883 = vmatpush1.msra.mxu0 %v812
    %884 = vmatprep.subr.mxu0 0.0
    %885 = vmatpush1.msra.mxu0 %v813
    %886 = vmatprep.subr.mxu0 0.0
    %887 = vmatpush1.msra.mxu0 %v814
    %888 = vmatprep.subr.mxu0 0.0
    %889 = vmatpush1.msra.mxu0 %v815
    %890 = vmatprep.subr.mxu0 0.0
    %891 = vmatpush1.msra.mxu0 %v816
    %892 = vmatprep.subr.mxu0 0.0
    %893 = vmatpush1.msra.mxu0 %v817
    %894 = vmatprep.subr.mxu0 0.0
    %895 = vmatpush1.msra.mxu0 %v818
    %896 = vmatprep.subr.mxu0 0.0
    %897 = vmatpush1.msra.mxu0 %v819
    %898 = vmatprep.subr.mxu0 0.0
    %899 = vmatpush1.msra.mxu0 %v820
    %900 = vmatprep.subr.mxu0 0.0
    %901 = vmatpush1.msra.mxu0 %v821
    %902 = vmatprep.subr.mxu0 0.0
    %903 = vmatpush1.msra.mxu0 %v822
    %904 = vmatprep.subr.mxu0 0.0
    %905 = vmatpush1.msra.mxu0 %v823
    %906 = vmatprep.subr.mxu0 0.0
    %907 = vmatpush1.msra.mxu0 %v824
    %908 = vmatprep.subr.mxu0 0.0
    %909 = vmatpush1.msra.mxu0 %v825
    %910 = vmatprep.subr.mxu0 0.0
    %911 = vmatpush1.msra.mxu0 %v826
    %912 = vmatprep.subr.mxu0 0.0
    %913 = vmatpush1.msra.mxu0 %v827
    %914 = vmatprep.subr.mxu0 0.0
    %915 = vmatpush1.msra.mxu0 %v828
    %916 = vmatprep.mubr.f32.mxu0 %v795
    %917 = vmatmul.mubr.f32.gmra.mrb[0].mxu0 %v794
    %v918 = vpop.f32.mrb[0].mxu0
    %v919 = vadd.f32 %v850, %v918
    %v920 = vpop.f32.mrb[0].mxu0
    %921 = vdwg.mxu0
    %922 = vmatprep.subr.mxu0 0.0
    %923 = vmatpush1.msra.mxu0 %v829
    %924 = vmatprep.subr.mxu0 0.0
    %925 = vmatpush1.msra.mxu0 %v830
    %926 = vmatprep.subr.mxu0 0.0
    %927 = vmatpush1.msra.mxu0 %v831
    %928 = vmatprep.subr.mxu0 0.0
    %929 = vmatpush1.msra.mxu0 %v832
    %930 = vmatprep.subr.mxu0 0.0
    %931 = vmatpush1.msra.mxu0 %v833
    %932 = vmatprep.subr.mxu0 0.0
    %933 = vmatpush1.msra.mxu0 %v834
    %934 = vmatprep.subr.mxu0 0.0
    %935 = vmatpush1.msra.mxu0 %v835
    %936 = vmatprep.subr.mxu0 0.0
    %937 = vmatpush1.msra.mxu0 %v836
    %938 = vmatprep.subr.mxu0 0.0
    %939 = vmatpush1.msra.mxu0 %v837
    %940 = vmatprep.subr.mxu0 0.0
    %941 = vmatpush1.msra.mxu0 %v838
    %942 = vmatprep.subr.mxu0 0.0
    %943 = vmatpush1.msra.mxu0 %v839
    %944 = vmatprep.subr.mxu0 0.0
    %945 = vmatpush1.msra.mxu0 %v840
    %946 = vmatprep.subr.mxu0 0.0
    %947 = vmatpush1.msra.mxu0 %v841
    %948 = vmatprep.subr.mxu0 0.0
    %949 = vmatpush1.msra.mxu0 %v842
    %950 = vmatprep.subr.mxu0 0.0
    %951 = vmatpush1.msra.mxu0 %v843
    %952 = vmatprep.subr.mxu0 0.0
    %953 = vmatpush1.msra.mxu0 %v844
    %954 = vmatprep.subr.mxu0 0.0
    %955 = vmatpush1.msra.mxu0 0.0
    %956 = vmatprep.subr.mxu0 0.0
    %957 = vmatpush1.msra.mxu0 0.0
    %958 = vmatprep.subr.mxu0 0.0
    %959 = vmatpush1.msra.mxu0 0.0
    %960 = vmatprep.subr.mxu0 0.0
    %961 = vmatpush1.msra.mxu0 0.0
    %962 = vmatprep.subr.mxu0 0.0
    %963 = vmatpush1.msra.mxu0 0.0
    %964 = vmatprep.subr.mxu0 0.0
    %965 = vmatpush1.msra.mxu0 0.0
    %966 = vmatprep.subr.mxu0 0.0
    %967 = vmatpush1.msra.mxu0 0.0
    %968 = vmatprep.subr.mxu0 0.0
    %969 = vmatpush1.msra.mxu0 0.0
    %970 = vmatprep.subr.mxu0 0.0
    %971 = vmatpush1.msra.mxu0 0.0
    %972 = vmatprep.subr.mxu0 0.0
    %973 = vmatpush1.msra.mxu0 0.0
    %974 = vmatprep.subr.mxu0 0.0
    %975 = vmatpush1.msra.mxu0 0.0
    %976 = vmatprep.subr.mxu0 0.0
    %977 = vmatpush1.msra.mxu0 0.0
    %978 = vmatprep.subr.mxu0 0.0
    %979 = vmatpush1.msra.mxu0 0.0
    %980 = vmatprep.subr.mxu0 0.0
    %981 = vmatpush1.msra.mxu0 0.0
    %982 = vmatprep.subr.mxu0 0.0
    %983 = vmatpush1.msra.mxu0 0.0
    %984 = vmatprep.subr.mxu0 0.0
    %985 = vmatpush1.msra.mxu0 0.0
    %986 = vmatprep.mubr.f32.mxu0 0.0
    %987 = vmatmul.mubr.f32.gmra.mrb[0].mxu0 %v796
    %v988 = vpop.f32.mrb[0].mxu0
    %v989 = vadd.f32 %v919, %v988
    %v990 = vpop.f32.mrb[0].mxu0
    %991 = vdwg.mxu0
    %992 = vst [vmem:[#allocation14] sm:$0xff] %v989
    // Predicated region
    $region58: #{tpu_custom_call.1} parent=1 // pred_check
      _
    $region59: #{tpu_custom_call.1} parent=1 // pred_check_branch
      %994 = sbr.rel (0) target = $region61
    $region60: #{tpu_custom_call.1} parent=1 // pred_region
      %s996 = ssub.s32 128, 128
      %997 = vsyncadd [#allocation4], %s996
      %s999 = sshll.u32 [#allocation14], 4
      %s1000 = int_to_ptr.vmem [resolvable:$true] %s999
      %1002 = dma.vmem_to_hbm [thread:$0]  %s1000, 128, %s7, [#allocation4]
    $region61: #{tpu_custom_call.1} parent=1 // pred_fallthru
      _
    // Predicated region
    $region62: #{tpu_custom_call.1} parent=1 // pred_check
      _
    $region63: #{tpu_custom_call.1} parent=1 // pred_check_branch
      %1004 = sbr.rel (0) target = $region65
    $region64: #{tpu_custom_call.1} parent=1 // pred_region
      %1005 = dma.done [#allocation4], 128
    $region65: #{tpu_custom_call.1} parent=1 // pred_fallthru
      _
    %1006 = vsyncpa [#allocation3], 1
    %1007 = vsyncpa [#allocation6], 1
    %1008 = vsyncpa [#allocation9], 1
    %1009 = vsyncpa [#allocation12], 1
    %1010 = vsyncpa [#allocation4], 1

</llo_original>
